<compile_context>
chip_gen: v6e
topology: v6e:2x2x1
jax: 0.10.0
libtpu: 0.0.40
codegen_flags: <defaults>
</compile_context>

<pallas_src>
import functools
import math

import jax
import jax.numpy as jnp
from jax.experimental import pallas as pl
from jax.experimental.pallas import tpu as pltpu

_LANE = 128
_MIB = 1024 * 1024


# ----------------------------------------------------------------------------
# Tiling helpers
# ----------------------------------------------------------------------------
def _cdiv(a, b):
    return -(-a // b)


def _round_up(v, m):
    return _cdiv(v, m) * m


def _pick_tile(total, max_tile, quantum):
    """Largest quantum-multiple tile <= max_tile (or `total` if it fits).

    Prefers a tile that divides `total` (skips ragged-edge masking) as long as
    it is at least half of the allowed maximum."""
    if total <= max_tile:
        return total
    cap = max(quantum, (max_tile // quantum) * quantum)
    t = cap
    while t >= max(quantum, cap // 2):
        if total % t == 0:
            return t
        t -= quantum
    return cap


def _vmem_limit_bytes():
    """Generation-aware VMEM budget with headroom below physical capacity."""
    cap = None
    try:
        info = pltpu.get_tpu_info()
        cap = getattr(info, "vmem_capacity_bytes", None)
    except Exception:
        cap = None
    if not cap:
        cap = 64 * _MIB  # conservative: v7x physical size (v5e/v6e have 128 MiB)
    return int(min(cap * 3 // 4, 96 * _MIB))


def _choose_tiles_3d(P, R, S, in_itemsize, out_itemsize, use_scratch,
                     block_budget, vmem_limit):
    pack = 8 * max(1, 4 // in_itemsize)       # sublane packing of input dtype
    out_pack = 8 * max(1, 4 // out_itemsize)  # sublane packing of output dtype
    lane_cap = 8192                           # no store win past ~4-8K lanes

    tile_s = _pick_tile(S, lane_cap, _LANE)
    tile_s_pad = _round_up(tile_s, _LANE)

    # Reduction tile: as tall as the per-block budget allows; prefer a divisor
    # of R so the ragged mask never runs.
    max_r = max(pack, block_budget // (tile_s_pad * in_itemsize))
    tile_r = _pick_tile(R, max_r, pack)
    tile_r_pad = _round_up(tile_r, pack)

    # ---- padded (physical) VMEM footprint per unit of tile_p ----
    in_bytes = tile_r_pad * tile_s_pad * in_itemsize           # input block
    out_bytes = out_pack * tile_s_pad * out_itemsize           # (.,1,.) -> 8/16 sublanes
    acc_bytes = 8 * tile_s_pad * 4 if use_scratch else 0       # f32 scratch
    per_p = 2 * in_bytes + 2 * out_bytes + acc_bytes           # in/out double-buffered

    headroom = 4 * _MIB
    tile_p = min(P,
                 max(1, block_budget // max(1, in_bytes)),
                 max(1, (vmem_limit - headroom) // max(1, per_p)))

    # v7x megacore: ensure >= 2 "parallel" tiles when the serial R axis is
    # long (harmless extra grid step on single-TC chips).
    if _cdiv(P, tile_p) * _cdiv(S, tile_s) == 1 and _cdiv(R, tile_r) > 1:
        if P > 1:
            tile_p = _cdiv(P, 2)
        elif S > _LANE:
            tile_s = _round_up(_cdiv(S, 2), _LANE)

    return tile_p, tile_r, tile_s


def _choose_tiles_2d(P, R, in_itemsize, out_itemsize, use_scratch,
                     block_budget, vmem_limit):
    pack = 8 * max(1, 4 // in_itemsize)
    out_pack = 8 * max(1, 4 // out_itemsize)
    lane_cap = 8192

    tile_r = _pick_tile(R, lane_cap, _LANE)   # reduced axis lives on lanes
    tile_r_pad = _round_up(tile_r, _LANE)

    max_p = max(pack, block_budget // (tile_r_pad * in_itemsize))
    tile_p = _pick_tile(P, max_p, pack)

    def footprint(tp):
        tp_in = _round_up(tp, pack) * tile_r_pad * in_itemsize
        tp_out = _round_up(tp, out_pack) * _LANE * out_itemsize
        tp_acc = _round_up(tp, 8) * _LANE * 4 if use_scratch else 0
        return 2 * tp_in + 2 * tp_out + tp_acc

    headroom = 4 * _MIB
    while tile_p > pack and footprint(tile_p) > vmem_limit - headroom:
        tile_p = max(pack, (tile_p // 2 // pack) * pack)

    # v7x megacore: >= 2 parallel (P) tiles when the lane/reduction axis is long.
    if _cdiv(P, tile_p) == 1 and _cdiv(R, tile_r) > 1 and P >= 2 * pack:
        tile_p = max(pack, (tile_p // 2 // pack) * pack)

    return tile_p, tile_r


# ----------------------------------------------------------------------------
# Kernel
# ----------------------------------------------------------------------------
def _make_avgpool_kernel(*, grid_r_axis, reduce_axis, inv_n, r_total, tile_r):
    def kernel(x_ref, o_ref, *scratch):
        # f32 VMEM scratch only when the output dtype is not f32; otherwise we
        # accumulate directly into the resident output block (its block index
        # is constant across the trailing "arbitrary" R grid axis).
        acc_ref = scratch[0] if scratch else o_ref
        r_idx = pl.program_id(grid_r_axis)
        last_r = pl.num_programs(grid_r_axis) - 1

        @pl.when(r_idx == 0)
        def _init():
            acc_ref[...] = jnp.zeros_like(acc_ref)

        def _accumulate(mask_ragged):
            x = x_ref[...].astype(jnp.float32)
            if mask_ragged:
                # Last R tile may read past the array end (undefined data);
                # zero those positions so they never reach the running sum.
                valid = r_total - r_idx * tile_r
                idx = jax.lax.broadcasted_iota(jnp.int32, x.shape, reduce_axis)
                x = jnp.where(idx < valid, x, 0.0)
            acc_ref[...] += jnp.sum(
                x, axis=reduce_axis, keepdims=True).astype(acc_ref.dtype)

        if r_total % tile_r == 0:
            _accumulate(False)                 # no mask ever needed
        else:
            @pl.when(r_idx != last_r)
            def _full():
                _accumulate(False)

            @pl.when(r_idx == last_r)
            def _ragged():
                _accumulate(True)

        @pl.when(r_idx == last_r)
        def _finalize():
            # NOTE: multiply by precomputed 1/n (can differ from torch's
            # sum/n in the last ulp; well within test tolerance).
            o_ref[...] = (acc_ref[...] * inv_n).astype(o_ref.dtype)

    return kernel


# ----------------------------------------------------------------------------
# Wrappers
# ----------------------------------------------------------------------------
def _avg_pool_3d(x3, n, out_dtype, vmem_limit, block_budget):
    P, R, S = x3.shape
    use_scratch = out_dtype != jnp.float32
    in_itemsize = jnp.dtype(x3.dtype).itemsize
    out_itemsize = jnp.dtype(out_dtype).itemsize

    tile_p, tile_r, tile_s = _choose_tiles_3d(
        P, R, S, in_itemsize, out_itemsize, use_scratch, block_budget, vmem_limit)
    grid = (_cdiv(P, tile_p), _cdiv(S, tile_s), _cdiv(R, tile_r))

    kernel = _make_avgpool_kernel(grid_r_axis=2, reduce_axis=1,
                                  inv_n=1.0 / float(n), r_total=R, tile_r=tile_r)
    scratch = [pltpu.VMEM((tile_p, 1, tile_s), jnp.float32)] if use_scratch else []

    out3 = pl.pallas_call(
        kernel,
        out_shape=jax.ShapeDtypeStruct((P, 1, S), out_dtype),
        grid_spec=pltpu.PrefetchScalarGridSpec(
            num_scalar_prefetch=0,
            grid=grid,
            in_specs=[pl.BlockSpec((tile_p, tile_r, tile_s),
                                   lambda p, s, r: (p, r, s))],
            out_specs=pl.BlockSpec((tile_p, 1, tile_s),
                                   lambda p, s, r: (p, 0, s)),
            scratch_shapes=scratch,
        ),
        compiler_params=pltpu.CompilerParams(
            dimension_semantics=("parallel", "parallel", "arbitrary"),
            vmem_limit_bytes=vmem_limit,
        ),
    )(x3)
    return out3.reshape(P, S)


def _avg_pool_2d(x2, n, out_dtype, vmem_limit, block_budget):
    P, R = x2.shape
    use_scratch = out_dtype != jnp.float32
    in_itemsize = jnp.dtype(x2.dtype).itemsize
    out_itemsize = jnp.dtype(out_dtype).itemsize

    tile_p, tile_r = _choose_tiles_2d(
        P, R, in_itemsize, out_itemsize, use_scratch, block_budget, vmem_limit)
    grid = (_cdiv(P, tile_p), _cdiv(R, tile_r))

    kernel = _make_avgpool_kernel(grid_r_axis=1, reduce_axis=1,
                                  inv_n=1.0 / float(n), r_total=R, tile_r=tile_r)
    scratch = [pltpu.VMEM((tile_p, 1), jnp.float32)] if use_scratch else []

    out2 = pl.pallas_call(
        kernel,
        out_shape=jax.ShapeDtypeStruct((P, 1), out_dtype),
        grid_spec=pltpu.PrefetchScalarGridSpec(
            num_scalar_prefetch=0,
            grid=grid,
            in_specs=[pl.BlockSpec((tile_p, tile_r), lambda p, r: (p, r))],
            out_specs=pl.BlockSpec((tile_p, 1), lambda p, r: (p, 0)),
            scratch_shapes=scratch,
        ),
        compiler_params=pltpu.CompilerParams(
            dimension_semantics=("parallel", "arbitrary"),
            vmem_limit_bytes=vmem_limit,
        ),
    )(x2)
    return out2.reshape(P)


def avg_pool(x, dim, n):
    """Pallas TPU equivalent of torch AvgPool.forward: x.sum(dim=dim) / n."""
    dim = dim % x.ndim
    out_shape = x.shape[:dim] + x.shape[dim + 1:]

    P = int(math.prod(x.shape[:dim]))
    R = int(x.shape[dim])
    S = int(math.prod(x.shape[dim + 1:]))

    # Match torch semantics: float stays float, int / n -> float.
    out_dtype = x.dtype if jnp.issubdtype(x.dtype, jnp.floating) else jnp.float32

    vmem_limit = _vmem_limit_bytes()
    block_budget = min(16 * _MIB, vmem_limit // 3)

    if S == 1:
        # Reducing the trailing axis: keep R lane-dense in a 2D (P, R) view
        # instead of a (P, R, 1) layout that would waste 127/128 lanes.
        out_flat = _avg_pool_2d(x.reshape(P, R), n, out_dtype,
                                vmem_limit, block_budget)
    else:
        # TODO(synk): 1 < S < 128 still under-utilises lanes (S/128); making it
        # lane-dense would need an HBM transpose, which costs more than it saves.
        out_flat = _avg_pool_3d(x.reshape(P, R, S), n, out_dtype,
                                vmem_limit, block_budget)

    return out_flat.reshape(out_shape)


# ----------------------------------------------------------------------------
# Self-test
# ----------------------------------------------------------------------------
if __name__ == "__main__":
    key = jax.random.PRNGKey(0)
    N, C, H, W = 2, 4, 16, 16
    x = jax.random.normal(key, (N, C, H, W), dtype=jnp.float32)

    # Interior-dim pooling (3D lane-dense path): mean over channels.
    y = avg_pool(x, dim=1, n=C)
    jax.block_until_ready(y)
    y_ref = jnp.sum(x, axis=1) / C
    assert y.shape == y_ref.shape == (N, H, W)
    assert jnp.allclose(y, y_ref, atol=1e-5, rtol=1e-5)

    # Trailing-dim pooling (2D lane-dense path): mean over W.
    y2 = avg_pool(x, dim=3, n=W)
    jax.block_until_ready(y2)
    y2_ref = jnp.sum(x, axis=3) / W
    assert y2.shape == y2_ref.shape == (N, C, H)
    assert jnp.allclose(y2, y2_ref, atol=1e-5, rtol=1e-5)

    print("KERNEL_OK")
</pallas_src>

<mosaic_0001>
module attributes {stable_mosaic.version = 11 : i64} {
  func.func @kernel(%arg0: i32, %arg1: i32, %arg2: i32, %arg3: memref<2x4x256xf32, #tpu.memory_space<vmem>>, %arg4: memref<2x1x256xf32, #tpu.memory_space<vmem>>) attributes {dimension_semantics = [#tpu.dimension_semantics<parallel>, #tpu.dimension_semantics<parallel>, #tpu.dimension_semantics<arbitrary>], iteration_bounds = array<i64: 1, 1, 1>, scalar_prefetch = 0 : i64, scratch_operands = 0 : i64, tpu.core_type = #tpu.core_type<tc>, window_params = [{transform_indices = @transform_0, window_bounds = array<i64: 2, 4, 256>}, {transform_indices = @transform_1, window_bounds = array<i64: 2, 1, 256>}]} {
    %c0_i32 = arith.constant 0 : i32
    %0 = arith.cmpi eq, %arg2, %c0_i32 : i32
    %1 = arith.extui %0 : i1 to i32
    %c0_i32_0 = arith.constant 0 : i32
    %2 = arith.cmpi ne, %1, %c0_i32_0 : i32
    scf.if %2 {
      %cst_11 = arith.constant 0.000000e+00 : f32
      %12 = vector.broadcast %cst_11 : f32 to vector<2x1x256xf32>
      %c0_12 = arith.constant 0 : index
      %c0_13 = arith.constant 0 : index
      %c0_14 = arith.constant 0 : index
      %13 = vector.load %arg4[%c0_12, %c0_13, %c0_14] : memref<2x1x256xf32, #tpu.memory_space<vmem>>, vector<2x1x256xf32>
      tpu.vector_store %arg4[%c0_12, %c0_13, %c0_14], %12 {strides = array<i32>} : memref<2x1x256xf32, #tpu.memory_space<vmem>>, vector<2x1x256xf32>,
    } else {
    }
    %c0 = arith.constant 0 : index
    %c0_1 = arith.constant 0 : index
    %c0_2 = arith.constant 0 : index
    %3 = vector.load %arg3[%c0, %c0_1, %c0_2] : memref<2x4x256xf32, #tpu.memory_space<vmem>>, vector<2x4x256xf32>
    %c0_3 = arith.constant 0 : index
    %c0_4 = arith.constant 0 : index
    %c0_5 = arith.constant 0 : index
    %4 = vector.load %arg4[%c0_3, %c0_4, %c0_5] : memref<2x1x256xf32, #tpu.memory_space<vmem>>, vector<2x1x256xf32>
    %cst = arith.constant dense<0.000000e+00> : vector<2x256xf32>
    %5 = vector.multi_reduction <add>, %3, %cst [1] : vector<2x4x256xf32> to vector<2x256xf32>
    %6 = vector.shape_cast %5 : vector<2x256xf32> to vector<2x1x256xf32>
    %7 = arith.addf %4, %6 : vector<2x1x256xf32>
    %c0_6 = arith.constant 0 : index
    %c0_7 = arith.constant 0 : index
    %c0_8 = arith.constant 0 : index
    %8 = vector.load %arg4[%c0_6, %c0_7, %c0_8] : memref<2x1x256xf32, #tpu.memory_space<vmem>>, vector<2x1x256xf32>
    tpu.vector_store %arg4[%c0_6, %c0_7, %c0_8], %7 {strides = array<i32>} : memref<2x1x256xf32, #tpu.memory_space<vmem>>, vector<2x1x256xf32>,
    %c0_i32_9 = arith.constant 0 : i32
    %9 = arith.cmpi eq, %arg2, %c0_i32_9 : i32
    %10 = arith.extui %9 : i1 to i32
    %c0_i32_10 = arith.constant 0 : i32
    %11 = arith.cmpi ne, %10, %c0_i32_10 : i32
    scf.if %11 {
      %c0_11 = arith.constant 0 : index
      %c0_12 = arith.constant 0 : index
      %c0_13 = arith.constant 0 : index
      %12 = vector.load %arg4[%c0_11, %c0_12, %c0_13] : memref<2x1x256xf32, #tpu.memory_space<vmem>>, vector<2x1x256xf32>
      %cst_14 = arith.constant 2.500000e-01 : f32
      %13 = vector.broadcast %cst_14 : f32 to vector<2x1x256xf32>
      %14 = arith.mulf %12, %13 : vector<2x1x256xf32>
      %c0_15 = arith.constant 0 : index
      %c0_16 = arith.constant 0 : index
      %c0_17 = arith.constant 0 : index
      %15 = vector.load %arg4[%c0_15, %c0_16, %c0_17] : memref<2x1x256xf32, #tpu.memory_space<vmem>>, vector<2x1x256xf32>
      tpu.vector_store %arg4[%c0_15, %c0_16, %c0_17], %14 {strides = array<i32>} : memref<2x1x256xf32, #tpu.memory_space<vmem>>, vector<2x1x256xf32>,
    } else {
    }
    return
  }
  func.func @transform_0(%arg0: i32, %arg1: i32, %arg2: i32) -> (i32, i32, i32) {
    %c0_i32 = arith.constant 0 : i32
    return %arg0, %arg2, %arg1 : i32, i32, i32
  }
  func.func @transform_1(%arg0: i32, %arg1: i32, %arg2: i32) -> (i32, i32, i32) {
    %c0_i32 = arith.constant 0 : i32
    %c0_i32_0 = arith.constant 0 : i32
    return %arg0, %c0_i32, %arg1 : i32, i32, i32
  }
}

</mosaic_0001>

<llo_original>
// kernel: tpu_custom_call.1
$region0: #{tpu_custom_call.1}
  #allocation0 [shape = 'u32[]', space=smem, size = 0x4, offset = 0x4, fixed_abs, tag = 'smem constant byte address 0x4 - core index']
  #allocation1 [shape = 'u32[144,128]{1,0:T(1,128)}', space=vmem, size = 0x12000, scoped, tag = 'internal scratch']
  %s0 = inlined_call_operand.hbm [shape: f32[2,4,256], index: 0, kind: input, shape index: {}]
  %s1 = inlined_call_operand.hbm [shape: f32[2,1,256], index: 1, kind: output, shape index: {}]
  %s2 = sld [smem:[#allocation0]]
  $region26: #{tpu_custom_call.1} parent=0
    _
  %s4 = ssub.s32 1, %s2
  %s5 = scalar_select 0, %s4, %s2
  $region1: #{tpu_custom_call.1} parent=0
    #allocation2 [shape = 'u8[8192]{0}', space=vmem, size = 0x2000, scoped, tag = 'input window, operand 0, single buffered']
    #allocation3 [shape = 's32[1]{0}', space=sflag, size = 0x4, scoped, tag = 'scoped memory for tpu_custom_call.1']
    #allocation4 [shape = 's32[1]{0}', space=sflag, size = 0x4, scoped, tag = 'scoped memory for tpu_custom_call.1']
    #allocation5 [shape = 'u8[2048]{0}', space=vmem, size = 0x800, scoped, tag = 'output window, operand 0, single buffered']
    %6 = vsyncpa [#allocation3], 0
    %7 = vsyncpa [#allocation4], 0
    // Predicated region
    $region2: #{tpu_custom_call.1} parent=1 // pred_check
      _
    $region3: #{tpu_custom_call.1} parent=1 // pred_check_branch
      %9 = sbr.rel (0) target = $region5
    $region4: #{tpu_custom_call.1} parent=1 // pred_region
      %s11 = ssub.s32 256, 256
      %12 = vsyncadd [#allocation3], %s11
      %s13 = sshll.u32 [#allocation2], 4
      %s14 = int_to_ptr.vmem [resolvable:$true] %s13
      %19 = dma.hbm_to_vmem [thread:$0]  %s0, 256, %s14, [#allocation3], 128, 128, 8
    $region5: #{tpu_custom_call.1} parent=1 // pred_fallthru
      _
    // Predicated region
    $region6: #{tpu_custom_call.1} parent=1 // pred_check
      _
    $region7: #{tpu_custom_call.1} parent=1 // pred_check_branch
      %21 = sbr.rel (0) target = $region9
    $region8: #{tpu_custom_call.1} parent=1 // pred_region
      %22 = dma.done [#allocation3], 256
    $region9: #{tpu_custom_call.1} parent=1 // pred_fallthru
      _
    %p23 = scmp.eq.s32.totalorder 0, 0
    // Predicated region
    $region10: #{tpu_custom_call.1} parent=1 // pred_check
      %p24 = pneg %p23
    $region11: #{tpu_custom_call.1} parent=1 // pred_check_branch
      %26 = sbr.rel (%p24) target = $region13
    $region12: #{tpu_custom_call.1} parent=1 // pred_region
      %v27 = vlaneseq
      %vm28 = vcmp.ge.s32.totalorder %v27, 0
      %vm29 = vcmp.lt.s32.totalorder %v27, 256
      %vm30 = vmand %vm28, %vm29
      %31 = vst.msk [vmem:[#allocation5] sm:$0x3] %vm30, 0.0
      %32 = vst.msk [vmem:[#allocation5 + $0x2] sm:$0x3] %vm30, 0.0
    $region13: #{tpu_custom_call.1} parent=1 // pred_fallthru
      _
    %v33 = vld [vmem:[#allocation2] sm:$0xff]
    %v34 = vld [vmem:[#allocation2 + $0x8] sm:$0xff]
    %v35 = vld [vmem:[#allocation5] sm:$0x3]
    %v36 = vld [vmem:[#allocation5 + $0x2] sm:$0x3]
    %v39 = vcombine.high %v33, %v33
    %v40 = vcombine.high %v34, %v34
    %vm43 = vcmask 1043456
    %v44 = vsel %vm43, %v33, 0.0
    %v45 = vrot.slane %v44, 4
    %v46 = vadd.f32 %v44, %v45
    %v47 = vrot.slane %v46, 2
    %v48 = vadd.f32 %v46, %v47
    %v49 = vrot.slane %v48, 1
    %v50 = vadd.f32 %v48, %v49
    %v51 = vsel %vm43, %v39, 0.0
    %v52 = vrot.slane %v51, 4
    %v53 = vadd.f32 %v51, %v52
    %v54 = vrot.slane %v53, 2
    %v55 = vadd.f32 %v53, %v54
    %v56 = vrot.slane %v55, 1
    %v57 = vadd.f32 %v55, %v56
    %v58 = vsel %vm43, %v34, 0.0
    %v59 = vrot.slane %v58, 4
    %v60 = vadd.f32 %v58, %v59
    %v61 = vrot.slane %v60, 2
    %v62 = vadd.f32 %v60, %v61
    %v63 = vrot.slane %v62, 1
    %v64 = vadd.f32 %v62, %v63
    %v65 = vsel %vm43, %v40, 0.0
    %v66 = vrot.slane %v65, 4
    %v67 = vadd.f32 %v65, %v66
    %v68 = vrot.slane %v67, 2
    %v69 = vadd.f32 %v67, %v68
    %v70 = vrot.slane %v69, 1
    %v71 = vadd.f32 %v69, %v70
    %v76 = vcombine.low %v50, %v57
    %v78 = vunpack.c.l.s4 1966171168
    %v79 = vunpack.c.0.s8 %v78
    %v80 = vlaneseq
    %v81 = vshrl.u32 %v80, 7
    %v82 = vsub.s32 %v79, %v81
    %v83 = vrot.slane %v76, %v82
    %v85 = vunpack.c.l.s4 1966171168
    %v86 = vunpack.c.0.s8 %v85
    %v87 = vlaneseq
    %v88 = vshrl.u32 %v87, 7
    %v89 = vsub.s32 %v86, %v88
    %v90 = vrot.slane %v83, %v89
    %v91 = vcombine.low %v64, %v71
    %v93 = vunpack.c.l.s4 1966171168
    %v94 = vunpack.c.0.s8 %v93
    %v95 = vlaneseq
    %v96 = vshrl.u32 %v95, 7
    %v97 = vsub.s32 %v94, %v96
    %v98 = vrot.slane %v91, %v97
    %v100 = vunpack.c.l.s4 1966171168
    %v101 = vunpack.c.0.s8 %v100
    %v102 = vlaneseq
    %v103 = vshrl.u32 %v102, 7
    %v104 = vsub.s32 %v101, %v103
    %v105 = vrot.slane %v98, %v104
    %v108 = vadd.f32 %v35, %v90
    %v109 = vadd.f32 %v36, %v105
    %v110 = vlaneseq
    %vm111 = vcmp.ge.s32.totalorder %v110, 0
    %vm112 = vcmp.lt.s32.totalorder %v110, 256
    %vm113 = vmand %vm111, %vm112
    %114 = vst.msk [vmem:[#allocation5] sm:$0x3] %vm113, %v108
    %115 = vst.msk [vmem:[#allocation5 + $0x2] sm:$0x3] %vm113, %v109
    // Predicated region
    $region14: #{tpu_custom_call.1} parent=1 // pred_check
      %p116 = pneg %p23
    $region15: #{tpu_custom_call.1} parent=1 // pred_check_branch
      %118 = sbr.rel (%p116) target = $region17
    $region16: #{tpu_custom_call.1} parent=1 // pred_region
      %v119 = vld [vmem:[#allocation5] sm:$0x3]
      %v120 = vld [vmem:[#allocation5 + $0x2] sm:$0x3]
      %v121 = vmul.f32 %v119, 0.25
      %v122 = vmul.f32 %v120, 0.25
      %123 = vst.msk [vmem:[#allocation5] sm:$0x3] %vm113, %v121
      %124 = vst.msk [vmem:[#allocation5 + $0x2] sm:$0x3] %vm113, %v122
    $region17: #{tpu_custom_call.1} parent=1 // pred_fallthru
      _
    // Predicated region
    $region18: #{tpu_custom_call.1} parent=1 // pred_check
      _
    $region19: #{tpu_custom_call.1} parent=1 // pred_check_branch
      %126 = sbr.rel (0) target = $region21
    $region20: #{tpu_custom_call.1} parent=1 // pred_region
      %s128 = ssub.s32 64, 64
      %129 = vsyncadd [#allocation4], %s128
      %s130 = sshll.u32 [#allocation5], 4
      %s131 = int_to_ptr.vmem [resolvable:$true] %s130
      %136 = dma.vmem_to_hbm [thread:$0]  %s131, 64, %s1, [#allocation4], 32, 32, 2
    $region21: #{tpu_custom_call.1} parent=1 // pred_fallthru
      _
    // Predicated region
    $region22: #{tpu_custom_call.1} parent=1 // pred_check
      _
    $region23: #{tpu_custom_call.1} parent=1 // pred_check_branch
      %138 = sbr.rel (0) target = $region25
    $region24: #{tpu_custom_call.1} parent=1 // pred_region
      %139 = dma.done [#allocation4], 64
    $region25: #{tpu_custom_call.1} parent=1 // pred_fallthru
      _
    %140 = vsyncpa [#allocation3], 1
    %141 = vsyncpa [#allocation4], 1

</llo_original>
